<compile_context>
chip_gen: v7x
topology: tpu7x:2x2x1
jax: 0.10.0
libtpu: 0.0.40
codegen_flags: <defaults>
</compile_context>

<pallas_src>
import functools
import math

import jax
import jax.numpy as jnp
from jax.experimental import pallas as pl
from jax.experimental.pallas import tpu as pltpu


# ----------------------------------------------------------------------------
# Kernel
# ----------------------------------------------------------------------------
def _linear_kernel(x_ref, w_ref, b_ref, o_ref, acc_ref, *, tk, x_resident):
    # x_ref: (tm, tk) or (tm, K) if the activation row-panel is resident.
    # w_ref: (tk, tn) bf16 (or f32), b_ref: (1, tn) f32, o_ref: (tm, tn).
    k = pl.program_id(2)

    @pl.when(k == 0)
    def _init():
        acc_ref[...] = jnp.zeros_like(acc_ref)

    if x_resident:
        start = pl.multiple_of(k * tk, 128)
        x_blk = x_ref[:, pl.ds(start, tk)]
    else:
        x_blk = x_ref[...]

    acc_ref[...] += jnp.dot(
        x_blk.astype(w_ref.dtype),           # bf16 x bf16 -> f32 on the MXU
        w_ref[...],
        preferred_element_type=jnp.float32,
    )

    @pl.when(k == pl.num_programs(2) - 1)
    def _finalize():
        # Bias added exactly once, in f32, before the final cast/store.
        o_ref[...] = (acc_ref[...] + b_ref[...]).astype(o_ref.dtype)


# ----------------------------------------------------------------------------
# Tile planning
# ----------------------------------------------------------------------------
def _cdiv(a, b):
    return -(-a // b)


def _round_up(x, m):
    return (x + m - 1) // m * m


def _tile_candidates(dim, mult, cap):
    """Descending candidate tile sizes (multiples of `mult`, <= round_up(dim))."""
    top = min(_round_up(dim, mult), cap)
    cands = [c for c in (1024, 768, 512, 384, 256, 128, 64, 32, 16, 8)
             if c <= top and c % mult == 0]
    if top not in cands:
        cands.insert(0, top)
    return cands


def _aligned_divisors(K, mult=128, cap=2048):
    """Descending K-tile sizes that divide K exactly (no ragged final K block)."""
    if K % mult != 0:
        return [K]                                   # single full-K block
    divs = [d for d in range(mult, min(K, cap) + 1, mult) if K % d == 0]
    return sorted(divs, reverse=True) if divs else [K]


def _footprint(tm, tn, tk, K, x_resident, w_bufs, x_bytes, w_bytes, out_bytes):
    kx = K if x_resident else tk
    return (2 * tm * kx * x_bytes             # activation buffers
            + w_bufs * tk * tn * w_bytes      # weight pipeline buffers
            + 2 * tn * 4                      # bias buffers
            + 2 * tm * tn * out_bytes         # output buffers
            + tm * tn * 4)                    # f32 accumulator scratch


def _physical_vmem_bytes():
    try:
        info = pltpu.get_tpu_info()
        return int(getattr(info, "vmem_capacity_bytes", 64 * 1024 * 1024))
    except Exception:
        return 64 * 1024 * 1024               # conservative (v7x per-core)


def _supports_pipeline_mode():
    try:
        pl.BlockSpec((8, 128), lambda j, i, k: (0, 0),
                     pipeline_mode=pl.Buffered(2))
        return True
    except Exception:
        return False


_HAS_PIPELINE_MODE = _supports_pipeline_mode()


def _plan(M, K, N, *, x_bytes, w_bytes, out_bytes):
    phys = _physical_vmem_bytes()
    vmem_limit = max(32 << 20, min(int(phys * 0.70), 100 << 20))
    tile_budget = int(vmem_limit * 0.85)

    tm_cands = _tile_candidates(M, 8, 1024)
    tn_cands = _tile_candidates(N, 128, 1024)
    tk_cands = _aligned_divisors(K, 128, 2048)

    single_m_block = M <= tm_cands[0]

    def fits(tm, tn, tk, x_res, bufs):
        return _footprint(tm, tn, tk, K, x_res, bufs,
                          x_bytes, w_bytes, out_bytes) <= tile_budget

    def search(x_res):
        # Priority: keep tm max, then tn, then tk (HBM ~ 1/tm + 1/tn).
        for tm in tm_cands:
            if x_res and tm < M:
                continue                       # residency needs a single M block
            for tn in tn_cands:
                for tk in tk_cands:
                    if fits(tm, tn, tk, x_res, 2):
                        return tm, tn, tk
        return None

    sel, x_resident = None, False
    for x_res in ([True, False] if single_m_block else [False]):
        got = search(x_res)
        if got is not None:
            sel, x_resident = got, x_res
            break
    if sel is None:
        # Pathological shape: smallest legal tiling; raised vmem_limit absorbs it.
        sel, x_resident = (tm_cands[-1], tn_cands[-1], tk_cands[-1]), False
    tm, tn, tk = sel
    x_resident = bool(x_resident and tk < K)

    # v7x megacore: prefer an even number of N blocks so both TensorCores get
    # half of the vocab sweep (no effect on single-TC v5e/v6e).
    if _cdiv(N, tn) > 1 and _cdiv(N, tn) % 2 == 1:
        for tn2 in tn_cands:
            if tn2 <= tn and 2 * tn2 >= tn and _cdiv(N, tn2) % 2 == 0 \
                    and fits(tm, tn2, tk, x_resident, 2):
                tn = tn2
                break

    # Deepen the weight pipeline for decode-shaped calls (tiny per-tile MXU
    # work would otherwise expose DMA issue latency).
    w_bufs = 2
    steps = _cdiv(N, tn) * _cdiv(M, tm) * _cdiv(K, tk)
    if _HAS_PIPELINE_MODE and M <= 128 and steps >= 3 \
            and fits(tm, tn, tk, x_resident, 3):
        w_bufs = 3

    return dict(tm=tm, tn=tn, tk=tk, x_resident=x_resident,
                w_bufs=w_bufs, vmem_limit=vmem_limit)


# ----------------------------------------------------------------------------
# pallas_call wrapper
# ----------------------------------------------------------------------------
@functools.partial(
    jax.jit,
    static_argnames=("tm", "tn", "tk", "x_resident", "w_bufs", "vmem_limit"))
def _projection_call(x2d, w_t, bias2d, *, tm, tn, tk, x_resident, w_bufs,
                     vmem_limit):
    M, K = x2d.shape
    _, N = w_t.shape
    nj, ni, nk = _cdiv(N, tn), _cdiv(M, tm), _cdiv(K, tk)
    grid = (nj, ni, nk)

    x_bytes = x2d.dtype.itemsize
    w_bytes = w_t.dtype.itemsize
    out_bytes = x2d.dtype.itemsize

    # Real streamed bytes: weight re-read once per M block; activations re-read
    # once per N block unless the resident row-panel keeps them in VMEM.
    w_stream = ni * K * N * w_bytes
    x_stream = (M * K * x_bytes) if (x_resident or ni * nj == 1) \
        else nj * M * K * x_bytes
    cost = pl.CostEstimate(
        flops=2 * M * N * K,
        transcendentals=0,
        bytes_accessed=w_stream + x_stream + nj * N * 4 + M * N * out_bytes,
    )

    kernel = functools.partial(_linear_kernel, tk=tk, x_resident=x_resident)

    if x_resident:
        # Block index constant across the (j, k) sweep -> fetched once.
        x_spec = pl.BlockSpec((tm, K), lambda j, i, k: (i, 0))
    else:
        x_spec = pl.BlockSpec((tm, tk), lambda j, i, k: (i, k))

    if w_bufs > 2 and _HAS_PIPELINE_MODE:
        w_spec = pl.BlockSpec((tk, tn), lambda j, i, k: (k, j),
                              pipeline_mode=pl.Buffered(w_bufs))
    else:
        w_spec = pl.BlockSpec((tk, tn), lambda j, i, k: (k, j))

    b_spec = pl.BlockSpec((1, tn), lambda j, i, k: (0, j))

    return pl.pallas_call(
        kernel,
        out_shape=jax.ShapeDtypeStruct((M, N), x2d.dtype),
        grid_spec=pltpu.PrefetchScalarGridSpec(
            num_scalar_prefetch=0,
            grid=grid,
            in_specs=[x_spec, w_spec, b_spec],
            out_specs=pl.BlockSpec((tm, tn), lambda j, i, k: (i, j)),
            scratch_shapes=[pltpu.VMEM((tm, tn), jnp.float32)],
        ),
        compiler_params=pltpu.CompilerParams(
            dimension_semantics=("parallel", "parallel", "arbitrary"),
            vmem_limit_bytes=vmem_limit,
        ),
        cost_estimate=cost,
    )(x2d, w_t, bias2d)


def output_projection(x2d, w_t, bias2d):
    """x2d: (M, K), w_t: (K, N) (pre-transposed, bf16), bias2d: (1, N) f32."""
    M, K = x2d.shape
    K2, N = w_t.shape
    assert K == K2, (K, K2)
    plan = _plan(M, K, N,
                 x_bytes=x2d.dtype.itemsize,
                 w_bytes=w_t.dtype.itemsize,
                 out_bytes=x2d.dtype.itemsize)
    return _projection_call(x2d, w_t, bias2d, **plan)


# ----------------------------------------------------------------------------
# Module
# ----------------------------------------------------------------------------
class OutputProcessor:
    """JAX/Pallas port of the PyTorch OutputProcessor (nn.Linear projection)."""

    def __init__(self, embedding_dim, vocab_size, key,
                 weight_dtype=jnp.bfloat16):
        self.embedding_dim = embedding_dim
        self.vocab_size = vocab_size
        k_w, k_b = jax.random.split(key)
        bound = 1.0 / math.sqrt(embedding_dim)
        # nn.Linear stores weight as (vocab_size, embedding_dim); materialize
        # the transposed, bf16 copy exactly once and drop the f32 original
        # (no duplicate K*N*4-byte HBM resident).
        w = jax.random.uniform(
            k_w, (vocab_size, embedding_dim), jnp.float32, -bound, bound)
        self.weight_t = jnp.asarray(w.T, dtype=weight_dtype)   # (K, N)
        del w
        self.bias = jax.random.uniform(
            k_b, (vocab_size,), jnp.float32, -bound, bound)
        self.bias2d = self.bias.reshape(1, vocab_size)

    def __call__(self, moe_output):
        # moe_output: (..., embedding_dim) -> logits: (..., vocab_size)
        lead_shape = moe_output.shape[:-1]
        x2d = moe_output.reshape(-1, self.embedding_dim)
        logits2d = output_projection(x2d, self.weight_t, self.bias2d)
        return logits2d.reshape(*lead_shape, self.vocab_size)


# ----------------------------------------------------------------------------
# Self-test
# ----------------------------------------------------------------------------
if __name__ == "__main__":
    key = jax.random.PRNGKey(0)
    k_params, k_x = jax.random.split(key)

    batch, seq, embedding_dim, vocab_size = 2, 8, 32, 128
    module = OutputProcessor(embedding_dim, vocab_size, k_params)

    moe_output = jax.random.normal(
        k_x, (batch, seq, embedding_dim), jnp.float32)

    logits = module(moe_output)
    jax.block_until_ready(logits)

    # Reference: same math as torch.nn.Linear, evaluated with the bf16-rounded
    # operands the kernel actually consumes, accumulated in f32.
    x_r = moe_output.astype(module.weight_t.dtype).astype(jnp.float32)
    w_r = module.weight_t.astype(jnp.float32)                   # (K, N)
    ref = x_r @ w_r + module.bias

    assert logits.shape == (batch, seq, vocab_size)
    assert logits.dtype == moe_output.dtype
    max_err = float(jnp.max(jnp.abs(logits - ref)))
    assert jnp.allclose(logits, ref, atol=1e-2, rtol=1e-2), max_err

    print("KERNEL_OK")
</pallas_src>

<mosaic_0001>
module attributes {stable_mosaic.version = 11 : i64} {
  func.func @_linear_kernel(%arg0: i32, %arg1: i32, %arg2: i32, %arg3: memref<16x32xf32, #tpu.memory_space<vmem>>, %arg4: memref<32x128xbf16, #tpu.memory_space<vmem>>, %arg5: memref<1x128xf32, #tpu.memory_space<vmem>>, %arg6: memref<16x128xf32, #tpu.memory_space<vmem>>, %arg7: memref<16x128xf32, #tpu.memory_space<vmem>>) attributes {dimension_semantics = [#tpu.dimension_semantics<parallel>, #tpu.dimension_semantics<parallel>, #tpu.dimension_semantics<arbitrary>], iteration_bounds = array<i64: 1, 1, 1>, scalar_prefetch = 0 : i64, scratch_operands = 1 : i64, tpu.core_type = #tpu.core_type<tc>, window_params = [{transform_indices = @transform_0, window_bounds = array<i64: 16, 32>}, {transform_indices = @transform_1, window_bounds = array<i64: 32, 128>}, {transform_indices = @transform_2, window_bounds = array<i64: 1, 128>}, {transform_indices = @transform_3, window_bounds = array<i64: 16, 128>}]} {
    %c0_i32 = arith.constant 0 : i32
    %0 = arith.cmpi eq, %arg2, %c0_i32 : i32
    %1 = arith.extui %0 : i1 to i32
    %c0_i32_0 = arith.constant 0 : i32
    %2 = arith.cmpi ne, %1, %c0_i32_0 : i32
    scf.if %2 {
      %cst_10 = arith.constant 0.000000e+00 : f32
      %13 = vector.broadcast %cst_10 : f32 to vector<16x128xf32>
      %c0_11 = arith.constant 0 : index
      %c0_12 = arith.constant 0 : index
      %14 = vector.load %arg7[%c0_11, %c0_12] : memref<16x128xf32, #tpu.memory_space<vmem>>, vector<16x128xf32>
      tpu.vector_store %arg7[%c0_11, %c0_12], %13 {strides = array<i32>} : memref<16x128xf32, #tpu.memory_space<vmem>>, vector<16x128xf32>,
    } else {
    }
    %c0 = arith.constant 0 : index
    %c0_1 = arith.constant 0 : index
    %3 = vector.load %arg3[%c0, %c0_1] : memref<16x32xf32, #tpu.memory_space<vmem>>, vector<16x32xf32>
    %c0_2 = arith.constant 0 : index
    %c0_3 = arith.constant 0 : index
    %4 = vector.load %arg7[%c0_2, %c0_3] : memref<16x128xf32, #tpu.memory_space<vmem>>, vector<16x128xf32>
    %5 = arith.truncf %3 : vector<16x32xf32> to vector<16x32xbf16>
    %c0_4 = arith.constant 0 : index
    %c0_5 = arith.constant 0 : index
    %6 = vector.load %arg4[%c0_4, %c0_5] : memref<32x128xbf16, #tpu.memory_space<vmem>>, vector<32x128xbf16>
    %cst = arith.constant dense<0.000000e+00> : vector<16x128xf32>
    %7 = tpu.matmul %5, %6, %cst {dimension_numbers = #tpu.dot_dimension_numbers<[1], [0], [0], [1], [0, 0, 1, 1], [], []>} : vector<16x32xbf16>, vector<32x128xbf16>, vector<16x128xf32> -> vector<16x128xf32>
    %8 = arith.addf %4, %7 : vector<16x128xf32>
    %c0_6 = arith.constant 0 : index
    %c0_7 = arith.constant 0 : index
    %9 = vector.load %arg7[%c0_6, %c0_7] : memref<16x128xf32, #tpu.memory_space<vmem>>, vector<16x128xf32>
    tpu.vector_store %arg7[%c0_6, %c0_7], %8 {strides = array<i32>} : memref<16x128xf32, #tpu.memory_space<vmem>>, vector<16x128xf32>,
    %c0_i32_8 = arith.constant 0 : i32
    %10 = arith.cmpi eq, %arg2, %c0_i32_8 : i32
    %11 = arith.extui %10 : i1 to i32
    %c0_i32_9 = arith.constant 0 : i32
    %12 = arith.cmpi ne, %11, %c0_i32_9 : i32
    scf.if %12 {
      %c0_10 = arith.constant 0 : index
      %c0_11 = arith.constant 0 : index
      %13 = vector.load %arg7[%c0_10, %c0_11] : memref<16x128xf32, #tpu.memory_space<vmem>>, vector<16x128xf32>
      %c0_12 = arith.constant 0 : index
      %c0_13 = arith.constant 0 : index
      %14 = vector.load %arg5[%c0_12, %c0_13] : memref<1x128xf32, #tpu.memory_space<vmem>>, vector<1x128xf32>
      %15 = vector.broadcast %14 : vector<1x128xf32> to vector<16x128xf32>
      %16 = arith.addf %13, %15 : vector<16x128xf32>
      %c0_14 = arith.constant 0 : index
      %c0_15 = arith.constant 0 : index
      %17 = vector.load %arg6[%c0_14, %c0_15] : memref<16x128xf32, #tpu.memory_space<vmem>>, vector<16x128xf32>
      tpu.vector_store %arg6[%c0_14, %c0_15], %16 {strides = array<i32>} : memref<16x128xf32, #tpu.memory_space<vmem>>, vector<16x128xf32>,
    } else {
    }
    return
  }
  func.func @transform_0(%arg0: i32, %arg1: i32, %arg2: i32) -> (i32, i32) {
    %c0_i32 = arith.constant 0 : i32
    return %arg1, %arg2 : i32, i32
  }
  func.func @transform_1(%arg0: i32, %arg1: i32, %arg2: i32) -> (i32, i32) {
    %c0_i32 = arith.constant 0 : i32
    return %arg2, %arg0 : i32, i32
  }
  func.func @transform_2(%arg0: i32, %arg1: i32, %arg2: i32) -> (i32, i32) {
    %c0_i32 = arith.constant 0 : i32
    %c0_i32_0 = arith.constant 0 : i32
    return %c0_i32, %arg0 : i32, i32
  }
  func.func @transform_3(%arg0: i32, %arg1: i32, %arg2: i32) -> (i32, i32) {
    %c0_i32 = arith.constant 0 : i32
    return %arg1, %arg0 : i32, i32
  }
}

</mosaic_0001>

<llo_original>
// kernel: _projection_call.1
$region0: #{_projection_call.1}
  #allocation0 [shape = 'u32[]', space=smem, size = 0x4, offset = 0x4, fixed_abs, tag = 'smem constant byte address 0x4 - core index']
  #allocation1 [shape = 'u32[144,128]{1,0:T(1,128)}', space=vmem, size = 0x12000, scoped, tag = 'internal scratch']
  #allocation2 [shape = 'f32[16,128]{1,0:T(8,128)}', space=vmem, size = 0x2000, scoped, tag = 'scratch operand']
  %s0 = inlined_call_operand.hbm [shape: f32[16,32], index: 0, kind: input, shape index: {}]
  %s1 = inlined_call_operand.hbm [shape: bf16[32,128], index: 1, kind: input, shape index: {}]
  %s2 = inlined_call_operand.vmem [shape: f32[1,128], index: 2, kind: input, shape index: {}]
  %s3 = inlined_call_operand.hbm [shape: f32[16,128], index: 3, kind: output, shape index: {}]
  %s4 = sld [smem:[#allocation0]]
  $region38: #{_projection_call.1} parent=0
    _
  %s6 = ssub.s32 1, %s4
  %s7 = scalar_select 0, %s6, %s4
  $region1: #{_projection_call.1} parent=0
    #allocation3 [shape = 'u8[8192]{0}', space=vmem, size = 0x2000, scoped, tag = 'input window, operand 0, single buffered']
    #allocation4 [shape = 's32[1]{0}', space=sflag, size = 0x4, scoped, tag = 'scoped memory for _projection_call.1']
    #allocation5 [shape = 's32[1]{0}', space=sflag, size = 0x4, scoped, tag = 'scoped memory for _projection_call.1']
    #allocation6 [shape = 'u8[8192]{0}', space=vmem, size = 0x2000, scoped, tag = 'input window, operand 1, single buffered']
    #allocation7 [shape = 's32[1]{0}', space=sflag, size = 0x4, scoped, tag = 'scoped memory for _projection_call.1']
    #allocation8 [shape = 'u8[8192]{0}', space=vmem, size = 0x2000, scoped, tag = 'output window, operand 0, single buffered']
    %8 = vsyncpa [#allocation4], 0
    %9 = vsyncpa [#allocation7], 0
    %10 = vsyncpa [#allocation5], 0
    // Predicated region
    $region2: #{_projection_call.1} parent=1 // pred_check
      _
    $region3: #{_projection_call.1} parent=1 // pred_check_branch
      %12 = sbr.rel (0) target = $region5
    $region4: #{_projection_call.1} parent=1 // pred_region
      %s14 = ssub.s32 256, 256
      %15 = vsyncadd [#allocation4], %s14
      %s16 = sshll.u32 [#allocation3], 4
      %s17 = int_to_ptr.vmem [resolvable:$true] %s16
      %22 = dma.hbm_to_vmem [thread:$0]  %s0, 256, %s17, [#allocation4], 128, 128, 8
    $region5: #{_projection_call.1} parent=1 // pred_fallthru
      _
    // Predicated region
    $region6: #{_projection_call.1} parent=1 // pred_check
      _
    $region7: #{_projection_call.1} parent=1 // pred_check_branch
      %24 = sbr.rel (0) target = $region9
    $region8: #{_projection_call.1} parent=1 // pred_region
      %s26 = ssub.s32 256, 256
      %27 = vsyncadd [#allocation7], %s26
      %s28 = sshll.u32 [#allocation6], 4
      %s29 = int_to_ptr.vmem [resolvable:$true] %s28
      %34 = dma.hbm_to_vmem [thread:$0]  %s1, 256, %s29, [#allocation7], 64, 64, 4
    $region9: #{_projection_call.1} parent=1 // pred_fallthru
      _
    // Predicated region
    $region10: #{_projection_call.1} parent=1 // pred_check
      _
    $region11: #{_projection_call.1} parent=1 // pred_check_branch
      %36 = sbr.rel (0) target = $region13
    $region12: #{_projection_call.1} parent=1 // pred_region
      _
    $region13: #{_projection_call.1} parent=1 // pred_fallthru
      _
    // Predicated region
    $region14: #{_projection_call.1} parent=1 // pred_check
      _
    $region15: #{_projection_call.1} parent=1 // pred_check_branch
      %38 = sbr.rel (0) target = $region17
    $region16: #{_projection_call.1} parent=1 // pred_region
      %39 = dma.done [#allocation4], 256
    $region17: #{_projection_call.1} parent=1 // pred_fallthru
      _
    // Predicated region
    $region18: #{_projection_call.1} parent=1 // pred_check
      _
    $region19: #{_projection_call.1} parent=1 // pred_check_branch
      %41 = sbr.rel (0) target = $region21
    $region20: #{_projection_call.1} parent=1 // pred_region
      %42 = dma.done [#allocation7], 256
    $region21: #{_projection_call.1} parent=1 // pred_fallthru
      _
    %p44 = scmp.eq.s32.totalorder 0, 0
    // Predicated region
    $region22: #{_projection_call.1} parent=1 // pred_check
      %p45 = pneg %p44
    $region23: #{_projection_call.1} parent=1 // pred_check_branch
      %47 = sbr.rel (%p45) target = $region25
    $region24: #{_projection_call.1} parent=1 // pred_region
      %48 = vst [vmem:[#allocation2] sm:$0xff] 0.0
      %49 = vst [vmem:[#allocation2 + $0x8] sm:$0xff] 0.0
    $region25: #{_projection_call.1} parent=1 // pred_fallthru
      _
    %v50 = vld [vmem:[#allocation3] sm:$0xff]
    %v51 = vld [vmem:[#allocation3 + $0x8] sm:$0xff]
    %v52 = vld [vmem:[#allocation2] sm:$0xff]
    %v53 = vld [vmem:[#allocation2 + $0x8] sm:$0xff]
    %v54 = vpack.c.bf16 %v51, %v50
    %v55 = vld [vmem:[#allocation6] sm:$0xf]
    %v56 = vld [vmem:[#allocation6 + $0x4] sm:$0xf]
    %v57 = vld [vmem:[#allocation6 + $0x8] sm:$0xf]
    %v58 = vld [vmem:[#allocation6 + $0xc] sm:$0xf]
    %v63 = vunpack.c.l.b16 %v55
    %v64 = vunpack.c.l.b16 %v56
    %v65 = vunpack.c.l.b16 %v57
    %v66 = vunpack.c.l.b16 %v58
    %v67 = vpack.c.b16 %v64, %v63
    %v68 = vpack.c.b16 %v66, %v65
    %vm71 = vcmask 261120
    %v73 = vsel %vm71, %v54, 0
    %75 = vmatprep.subr.bf16.mxu0 0
    %76 = vmatpush1.bf16.msra.mxu0 %v67
    %77 = vmatprep.subr.bf16.mxu0 0
    %78 = vmatpush1.bf16.msra.mxu0 %v68
    %79 = vmatprep.subr.bf16.mxu0 0
    %80 = vmatpush1.bf16.msra.mxu0 0
    %81 = vmatprep.subr.bf16.mxu0 0
    %82 = vmatpush1.bf16.msra.mxu0 0
    %83 = vmatprep.subr.bf16.mxu0 0
    %84 = vmatpush1.bf16.msra.mxu0 0
    %85 = vmatprep.subr.bf16.mxu0 0
    %86 = vmatpush1.bf16.msra.mxu0 0
    %87 = vmatprep.subr.bf16.mxu0 0
    %88 = vmatpush1.bf16.msra.mxu0 0
    %89 = vmatprep.subr.bf16.mxu0 0
    %90 = vmatpush1.bf16.msra.mxu0 0
    %91 = vmatprep.subr.bf16.mxu0 0
    %92 = vmatpush1.bf16.msra.mxu0 0
    %93 = vmatprep.subr.bf16.mxu0 0
    %94 = vmatpush1.bf16.msra.mxu0 0
    %95 = vmatprep.subr.bf16.mxu0 0
    %96 = vmatpush1.bf16.msra.mxu0 0
    %97 = vmatprep.subr.bf16.mxu0 0
    %98 = vmatpush1.bf16.msra.mxu0 0
    %99 = vmatprep.subr.bf16.mxu0 0
    %100 = vmatpush1.bf16.msra.mxu0 0
    %101 = vmatprep.subr.bf16.mxu0 0
    %102 = vmatpush1.bf16.msra.mxu0 0
    %103 = vmatprep.subr.bf16.mxu0 0
    %104 = vmatpush1.bf16.msra.mxu0 0
    %105 = vmatprep.subr.bf16.mxu0 0
    %106 = vmatpush1.bf16.msra.mxu0 0
    %107 = vmatprep.mubr.bf16.mxu0 0
    %108 = vmatmul.mubr.bf16.gmra.mrb[0].mxu0 %v73
    %v109 = vpop.f32.mrb[0].mxu0
    %v110 = vadd.f32 0.0, %v109
    %v111 = vpop.f32.mrb[0].mxu0
    %v112 = vpop.f32.mrb[0].mxu0
    %v113 = vadd.f32 0.0, %v112
    %v114 = vpop.f32.mrb[0].mxu0
    %115 = vdwg.mxu0
    %v116 = vadd.f32 %v52, %v110
    %v117 = vadd.f32 %v53, %v113
    %118 = vst [vmem:[#allocation2] sm:$0xff] %v116
    %119 = vst [vmem:[#allocation2 + $0x8] sm:$0xff] %v117
    // Predicated region
    $region26: #{_projection_call.1} parent=1 // pred_check
      %p120 = pneg %p44
    $region27: #{_projection_call.1} parent=1 // pred_check_branch
      %122 = sbr.rel (%p120) target = $region29
    $region28: #{_projection_call.1} parent=1 // pred_region
      %v123 = vld [vmem:[#allocation2] sm:$0xff]
      %v124 = vld [vmem:[#allocation2 + $0x8] sm:$0xff]
      %v125 = vld [vmem:[%s2] sm:$0x1]
      %v127 = vlaneseq
      %v128 = vshrl.u32 %v127, 7
      %v129 = vsub.s32 0, %v128
      %v130 = vrot.slane %v125, %v129
      %v132 = vadd.f32 %v123, %v130
      %v133 = vadd.f32 %v124, %v130
      %134 = vst [vmem:[#allocation8] sm:$0xff] %v132
      %135 = vst [vmem:[#allocation8 + $0x8] sm:$0xff] %v133
    $region29: #{_projection_call.1} parent=1 // pred_fallthru
      _
    // Predicated region
    $region30: #{_projection_call.1} parent=1 // pred_check
      _
    $region31: #{_projection_call.1} parent=1 // pred_check_branch
      %137 = sbr.rel (0) target = $region33
    $region32: #{_projection_call.1} parent=1 // pred_region
      %s139 = ssub.s32 256, 256
      %140 = vsyncadd [#allocation5], %s139
      %s141 = sshll.u32 [#allocation8], 4
      %s142 = int_to_ptr.vmem [resolvable:$true] %s141
      %147 = dma.vmem_to_hbm [thread:$0]  %s142, 256, %s3, [#allocation5], 128, 128, 8
    $region33: #{_projection_call.1} parent=1 // pred_fallthru
      _
    // Predicated region
    $region34: #{_projection_call.1} parent=1 // pred_check
      _
    $region35: #{_projection_call.1} parent=1 // pred_check_branch
      %149 = sbr.rel (0) target = $region37
    $region36: #{_projection_call.1} parent=1 // pred_region
      %150 = dma.done [#allocation5], 256
    $region37: #{_projection_call.1} parent=1 // pred_fallthru
      _
    %151 = vsyncpa [#allocation4], 1
    %152 = vsyncpa [#allocation7], 1
    %153 = vsyncpa [#allocation5], 1

</llo_original>
